<compile_context>
chip_gen: v5e
topology: v5e:2x2
jax: 0.10.0
libtpu: 0.0.40
codegen_flags: <defaults>
</compile_context>

<pallas_src>
import jax
import jax.numpy as jnp
from jax.experimental import pallas as pl
from jax.experimental.pallas import tpu as pltpu

TOKEN_ALIGN = 16     # bf16 packs 16 rows per vreg; keep token tiles 16-aligned
MAX_TILE_T = 4096    # token-tile cap: 4096*32*4B*(in+out)*2 bufs ~= 4 MiB VMEM


def _round_up(x: int, m: int) -> int:
    return ((x + m - 1) // m) * m


# ---------------------------------------------------------------------------
# Pallas kernel: one (tile_t, h_in) token tile of y = x @ W + b.
# ---------------------------------------------------------------------------
def _linear_kernel(x_ref, w_ref, b_ref, o_ref):
    # f32 activations are cast to bf16 on the VPU *inside* the kernel (no
    # separate pre-pass over HBM); bf16 x bf16 -> f32 accumulate on the MXU;
    # bias add stays f32 on the VPU; output stored f32 at the logical width.
    x = x_ref[...].astype(jnp.bfloat16)
    acc = jnp.dot(x, w_ref[...], preferred_element_type=jnp.float32)
    o_ref[...] = acc + b_ref[...]


def _pallas_linear(x2d: jax.Array, w_bf16: jax.Array, b_f32: jax.Array,
                   tile_t: int) -> jax.Array:
    """x2d: [T, h_in] f32, w_bf16: [h_in, h_out] bf16, b_f32: [1, h_out] f32."""
    T, h_in = x2d.shape
    h_out = w_bf16.shape[1]
    grid_t = pl.cdiv(T, tile_t)   # uneven T handled via a partial last block

    cost = pl.CostEstimate(
        flops=2 * T * h_in * h_out,
        transcendentals=0,
        bytes_accessed=(T * h_in * 4          # x read once, f32, unpadded
                        + h_in * h_out * 2    # W read once (constant index map)
                        + h_out * 4           # bias
                        + T * h_out * 4),     # y written once, f32, h_out wide
    )

    return pl.pallas_call(
        _linear_kernel,
        out_shape=jax.ShapeDtypeStruct((T, h_out), jnp.float32),
        grid=(grid_t,),
        in_specs=[
            # x: tiled over tokens; hidden dim equals the full (unpadded) array.
            pl.BlockSpec((tile_t, h_in), lambda i: (i, 0)),
            # W, b: constant index map -> fetched once, VMEM-resident.
            # (At hidden=32 they are ~2 KiB; for hidden >= 2-4K, single-buffer
            #  with pipeline_mode=pl.Buffered(1) and add K/N grid tiling so W
            #  is not fully resident on v7x's 64 MiB VMEM.)
            pl.BlockSpec((h_in, h_out), lambda i: (0, 0)),
            pl.BlockSpec((1, h_out), lambda i: (0, 0)),
        ],
        out_specs=pl.BlockSpec((tile_t, h_out), lambda i: (i, 0)),
        compiler_params=pltpu.CompilerParams(
            dimension_semantics=("parallel",),   # megacore / v7x 2-TC sharding
            vmem_limit_bytes=32 * 1024 * 1024,
        ),
        cost_estimate=cost,
    )(x2d, w_bf16, b_f32)


@jax.jit
def _linear_forward_2d(x2d: jax.Array, w_bf16: jax.Array,
                       b_f32: jax.Array) -> jax.Array:
    """x2d: [T, h_in] f32 -> [T, h_out] f32.  All shape logic is trace-time."""
    T, _ = x2d.shape

    # Pad tokens only to the 16-row sublane granularity (no tile-multiple
    # rounding); for typical T this is a no-op and the slice below vanishes.
    T_pad = _round_up(T, TOKEN_ALIGN)
    if T_pad != T:
        x2d = jnp.pad(x2d, ((0, T_pad - T), (0, 0)))

    if T_pad <= TOKEN_ALIGN:
        tile_t = T_pad
    else:
        # >= 2 token tiles whenever possible so "parallel" can use both v7x
        # TensorCores; cap the tile to amortize per-step overhead on v5e/v6e.
        tile_t = min(MAX_TILE_T, _round_up(pl.cdiv(T_pad, 2), TOKEN_ALIGN))

    y = _pallas_linear(x2d, w_bf16, b_f32, tile_t)
    return y if T_pad == T else y[:T]


# ---------------------------------------------------------------------------
# Synthetic stand-in for the torch.jit.ScriptModule being wrapped.
# ---------------------------------------------------------------------------
class SyntheticScriptedLinear:
    """Deterministic stand-in for an arbitrary torch.jit.ScriptModule."""

    def __init__(self, hidden: int = 32):
        self.hidden = hidden
        kw, kb = jax.random.split(jax.random.PRNGKey(42))
        # Logical parameters, f32; bf16 copy of W prepared once for the MXU.
        self.weight = jax.random.normal(kw, (hidden, hidden), jnp.float32) * 0.02
        self.bias = jax.random.normal(kb, (1, hidden), jnp.float32) * 0.01
        self.weight_bf16 = self.weight.astype(jnp.bfloat16)
        self.original_name = "SyntheticScriptedLinear"

    def __call__(self, x, *args, **kwargs):
        # x: [..., hidden] -> flatten leading dims into a token axis.
        lead_shape = x.shape[:-1]
        x2d = x.reshape(-1, x.shape[-1])
        y2d = _linear_forward_2d(x2d, self.weight_bf16, self.bias)
        return y2d.reshape(*lead_shape, self.hidden)

    def __repr__(self):
        return f"{self.original_name}(hidden={self.hidden})"


# ---------------------------------------------------------------------------
# ScriptModuleWrapper: exact forward-delegation semantics of the PyTorch module.
# ---------------------------------------------------------------------------
class ScriptModuleWrapper:
    """Wraps a scripted module; forward() delegates all args/kwargs to it."""

    def __init__(self, module):
        object.__setattr__(self, "wrapped_module", module)

    def forward(self, *args, **kwargs):
        return self.wrapped_module(*args, **kwargs)

    def __call__(self, *args, **kwargs):
        return self.forward(*args, **kwargs)

    def __getattr__(self, name):
        # Attributes not found on the wrapper fall through to the wrapped module.
        return getattr(object.__getattribute__(self, "wrapped_module"), name)

    def __repr__(self):
        return f"ScriptModuleWrapper({self.wrapped_module.__repr__()})"

    # TODO(synk): the `__class__` spoof to torch.jit.ScriptModule and the
    # input/output hook-capture machinery are PyTorch-framework behaviors with
    # no JAX/Pallas equivalent; only the forward delegation is reproduced.


if __name__ == "__main__":
    batch, seq, hidden = 2, 8, 32
    x = jax.random.normal(jax.random.PRNGKey(0), (batch, seq, hidden), jnp.float32)

    wrapped = SyntheticScriptedLinear(hidden=hidden)
    model = ScriptModuleWrapper(wrapped)

    out = model(x)
    jax.block_until_ready(out)

    # Sanity checks: shape, delegation semantics, numerical match vs a plain
    # JAX reference computed with the same bf16-input / f32-accumulate recipe.
    assert out.shape == (batch, seq, hidden)
    xb = x.reshape(-1, hidden).astype(jnp.bfloat16)
    ref = jnp.dot(xb, wrapped.weight_bf16,
                  preferred_element_type=jnp.float32) + wrapped.bias
    ref = ref.reshape(batch, seq, hidden)
    assert jnp.allclose(out, ref, atol=1e-4, rtol=1e-4)
    # Attribute forwarding (mirrors __getattr__ fallthrough in the torch code).
    assert model.original_name == "SyntheticScriptedLinear"

    print("KERNEL_OK")
</pallas_src>

<mosaic_0001>
module attributes {stable_mosaic.version = 11 : i64} {
  func.func @_linear_kernel(%arg0: i32, %arg1: memref<16x32xf32, #tpu.memory_space<vmem>>, %arg2: memref<32x32xbf16, #tpu.memory_space<vmem>>, %arg3: memref<1x32xf32, #tpu.memory_space<vmem>>, %arg4: memref<16x32xf32, #tpu.memory_space<vmem>>) attributes {dimension_semantics = [#tpu.dimension_semantics<parallel>], iteration_bounds = array<i64: 1>, scalar_prefetch = 0 : i64, scratch_operands = 0 : i64, tpu.core_type = #tpu.core_type<tc>, window_params = [{transform_indices = @transform_0, window_bounds = array<i64: 16, 32>}, {pipeline_mode = #tpu.pipeline_mode<synchronous>, transform_indices = @transform_1, window_bounds = array<i64: 32, 32>}, {pipeline_mode = #tpu.pipeline_mode<synchronous>, transform_indices = @transform_2, window_bounds = array<i64: 1, 32>}, {transform_indices = @transform_3, window_bounds = array<i64: 16, 32>}]} {
    %c0 = arith.constant 0 : index
    %c0_0 = arith.constant 0 : index
    %0 = vector.load %arg1[%c0, %c0_0] : memref<16x32xf32, #tpu.memory_space<vmem>>, vector<16x32xf32>
    %1 = arith.truncf %0 : vector<16x32xf32> to vector<16x32xbf16>
    %c0_1 = arith.constant 0 : index
    %c0_2 = arith.constant 0 : index
    %2 = vector.load %arg2[%c0_1, %c0_2] : memref<32x32xbf16, #tpu.memory_space<vmem>>, vector<32x32xbf16>
    %cst = arith.constant dense<0.000000e+00> : vector<16x32xf32>
    %3 = tpu.matmul %1, %2, %cst {dimension_numbers = #tpu.dot_dimension_numbers<[1], [0], [0], [1], [0, 0, 1, 1], [], []>} : vector<16x32xbf16>, vector<32x32xbf16>, vector<16x32xf32> -> vector<16x32xf32>
    %c0_3 = arith.constant 0 : index
    %c0_4 = arith.constant 0 : index
    %4 = vector.load %arg3[%c0_3, %c0_4] : memref<1x32xf32, #tpu.memory_space<vmem>>, vector<1x32xf32>
    %5 = vector.broadcast %4 : vector<1x32xf32> to vector<16x32xf32>
    %6 = arith.addf %3, %5 : vector<16x32xf32>
    %c0_5 = arith.constant 0 : index
    %c0_6 = arith.constant 0 : index
    %7 = vector.load %arg4[%c0_5, %c0_6] : memref<16x32xf32, #tpu.memory_space<vmem>>, vector<16x32xf32>
    tpu.vector_store %arg4[%c0_5, %c0_6], %6 {strides = array<i32>} : memref<16x32xf32, #tpu.memory_space<vmem>>, vector<16x32xf32>,
    return
  }
  func.func @transform_0(%arg0: i32) -> (i32, i32) {
    %c0_i32 = arith.constant 0 : i32
    %c0_i32_0 = arith.constant 0 : i32
    return %arg0, %c0_i32 : i32, i32
  }
  func.func @transform_1(%arg0: i32) -> (i32, i32) {
    %c0_i32 = arith.constant 0 : i32
    %c0_i32_0 = arith.constant 0 : i32
    %c0_i32_1 = arith.constant 0 : i32
    return %c0_i32, %c0_i32_0 : i32, i32
  }
  func.func @transform_2(%arg0: i32) -> (i32, i32) {
    %c0_i32 = arith.constant 0 : i32
    %c0_i32_0 = arith.constant 0 : i32
    %c0_i32_1 = arith.constant 0 : i32
    return %c0_i32, %c0_i32_0 : i32, i32
  }
  func.func @transform_3(%arg0: i32) -> (i32, i32) {
    %c0_i32 = arith.constant 0 : i32
    %c0_i32_0 = arith.constant 0 : i32
    return %arg0, %c0_i32 : i32, i32
  }
}

</mosaic_0001>

<llo_original>
// kernel: _linear_forward_2d.1
$region0: #{_linear_forward_2d.1}
  #allocation0 [shape = 'u32[]', space=smem, size = 0x4, offset = 0x4, fixed_abs, tag = 'smem constant byte address 0x4 - core index']
  #allocation1 [shape = 'u32[72,128]{1,0:T(1,128)}', space=vmem, size = 0x9000, scoped, tag = 'internal scratch']
  %s0 = inlined_call_operand.hbm [shape: f32[16,32], index: 0, kind: input, shape index: {}]
  %s1 = inlined_call_operand.hbm [shape: bf16[32,32], index: 1, kind: input, shape index: {}]
  %s2 = inlined_call_operand.vmem [shape: f32[1,32], index: 2, kind: input, shape index: {}]
  %s3 = inlined_call_operand.hbm [shape: f32[16,32], index: 3, kind: output, shape index: {}]
  %s4 = sld [smem:[#allocation0]]
  $region30: #{_linear_forward_2d.1} parent=0
    _
  %s6 = ssub.s32 1, %s4
  %s7 = scalar_select 0, %s6, %s4
  $region1: #{_linear_forward_2d.1} parent=0
    #allocation2 [shape = 'u8[8192]{0}', space=vmem, size = 0x2000, scoped, tag = 'input window, operand 0, single buffered']
    #allocation3 [shape = 's32[1]{0}', space=sflag, size = 0x4, scoped, tag = 'scoped memory for _linear_forward_2d.1']
    #allocation4 [shape = 's32[1]{0}', space=sflag, size = 0x4, scoped, tag = 'scoped memory for _linear_forward_2d.1']
    #allocation5 [shape = 'u8[8192]{0}', space=vmem, size = 0x2000, scoped, tag = 'input window, operand 1, single buffered']
    #allocation6 [shape = 's32[1]{0}', space=sflag, size = 0x4, scoped, tag = 'scoped memory for _linear_forward_2d.1']
    #allocation7 [shape = 'u8[8192]{0}', space=vmem, size = 0x2000, scoped, tag = 'output window, operand 0, single buffered']
    %8 = vsyncpa [#allocation3], 0
    %9 = vsyncpa [#allocation6], 0
    %10 = vsyncpa [#allocation4], 0
    // Predicated region
    $region2: #{_linear_forward_2d.1} parent=1 // pred_check
      _
    $region3: #{_linear_forward_2d.1} parent=1 // pred_check_branch
      %12 = sbr.rel (0) target = $region5
    $region4: #{_linear_forward_2d.1} parent=1 // pred_region
      %14 = vsyncadd [#allocation3], 0
      %s15 = sshll.u32 %s0, 4
      %s16 = int_to_ptr.hbm [resolvable:$true] %s15
      %s17 = sshll.u32 [#allocation2], 4
      %s18 = int_to_ptr.vmem [resolvable:$true] %s17
      %23 = dma.hbm_to_vmem [thread:$0]  %s16, 256, %s18, [#allocation3], 128, 128, 8
    $region5: #{_linear_forward_2d.1} parent=1 // pred_fallthru
      _
    // Predicated region
    $region6: #{_linear_forward_2d.1} parent=1 // pred_check
      _
    $region7: #{_linear_forward_2d.1} parent=1 // pred_check_branch
      %25 = sbr.rel (0) target = $region9
    $region8: #{_linear_forward_2d.1} parent=1 // pred_region
      %27 = vsyncadd [#allocation6], 0
      %s28 = sshll.u32 %s1, 4
      %s29 = int_to_ptr.hbm [resolvable:$true] %s28
      %s30 = sshll.u32 [#allocation5], 4
      %s31 = int_to_ptr.vmem [resolvable:$true] %s30
      %36 = dma.hbm_to_vmem [thread:$0]  %s29, 256, %s31, [#allocation6], 64, 64, 4
    $region9: #{_linear_forward_2d.1} parent=1 // pred_fallthru
      _
    // Predicated region
    $region10: #{_linear_forward_2d.1} parent=1 // pred_check
      _
    $region11: #{_linear_forward_2d.1} parent=1 // pred_check_branch
      %38 = sbr.rel (0) target = $region13
    $region12: #{_linear_forward_2d.1} parent=1 // pred_region
      _
    $region13: #{_linear_forward_2d.1} parent=1 // pred_fallthru
      _
    // Predicated region
    $region14: #{_linear_forward_2d.1} parent=1 // pred_check
      _
    $region15: #{_linear_forward_2d.1} parent=1 // pred_check_branch
      %40 = sbr.rel (0) target = $region17
    $region16: #{_linear_forward_2d.1} parent=1 // pred_region
      %42 = dma.done [#allocation3], 256
    $region17: #{_linear_forward_2d.1} parent=1 // pred_fallthru
      _
    // Predicated region
    $region18: #{_linear_forward_2d.1} parent=1 // pred_check
      _
    $region19: #{_linear_forward_2d.1} parent=1 // pred_check_branch
      %44 = sbr.rel (0) target = $region21
    $region20: #{_linear_forward_2d.1} parent=1 // pred_region
      %46 = dma.done [#allocation6], 256
    $region21: #{_linear_forward_2d.1} parent=1 // pred_fallthru
      _
    %v48 = vld [vmem:[#allocation2] sm:$0xff]
    %v49 = vld [vmem:[#allocation2 + $0x8] sm:$0xff]
    %v50 = vpack.c.bf16 %v49, %v48
    %v51 = vld [vmem:[#allocation5] sm:$0xf]
    %v52 = vld [vmem:[#allocation5 + $0x4] sm:$0xf]
    %v53 = vld [vmem:[#allocation5 + $0x8] sm:$0xf]
    %v54 = vld [vmem:[#allocation5 + $0xc] sm:$0xf]
    %v55 = vld [vmem:[%s2] sm:$0x1]
    %v57 = vperm.slane %v55, 0
    %v63 = vunpack.c.l.b16 %v51
    %v64 = vunpack.c.l.b16 %v52
    %v65 = vunpack.c.l.b16 %v53
    %v66 = vunpack.c.l.b16 %v54
    %v67 = vpack.c.b16 %v64, %v63
    %v68 = vpack.c.b16 %v66, %v65
    %vm71 = vcmask 261120
    %v73 = vsel %vm71, %v50, 0
    %75 = vmatpush.bf16.msra.mxu0 0
    %76 = vmatpush.bf16.msra.mxu0 0
    %77 = vmatpush.bf16.msra.mxu0 0
    %78 = vmatpush.bf16.msra.mxu0 0
    %79 = vmatpush.bf16.msra.mxu0 0
    %80 = vmatpush.bf16.msra.mxu0 0
    %81 = vmatpush.bf16.msra.mxu0 %v68
    %82 = vmatpush.bf16.msra.mxu0 %v67
    %83 = vmatmul.bf16.gmra.mxu0 %v73
    %v84 = vpop.f32.mrf.mxu0
    %v85 = vadd.f32 %v57, %v84
    %v86 = vpop.f32.mrf.mxu0
    %v87 = vadd.f32 %v57, %v86
    %88 = vdwg.mxu0
    %89 = vst.msk [vmem:[#allocation7] sm:$0xff] %vm71, %v85
    %90 = vst.msk [vmem:[#allocation7 + $0x8] sm:$0xff] %vm71, %v87
    // Predicated region
    $region22: #{_linear_forward_2d.1} parent=1 // pred_check
      _
    $region23: #{_linear_forward_2d.1} parent=1 // pred_check_branch
      %92 = sbr.rel (0) target = $region25
    $region24: #{_linear_forward_2d.1} parent=1 // pred_region
      %94 = vsyncadd [#allocation4], 0
      %s95 = sshll.u32 [#allocation7], 4
      %s96 = int_to_ptr.vmem [resolvable:$true] %s95
      %s97 = sshll.u32 %s3, 4
      %s98 = int_to_ptr.hbm [resolvable:$true] %s97
      %103 = dma.vmem_to_hbm [thread:$0]  %s96, 256, %s98, [#allocation4], 128, 128, 8
    $region25: #{_linear_forward_2d.1} parent=1 // pred_fallthru
      _
    // Predicated region
    $region26: #{_linear_forward_2d.1} parent=1 // pred_check
      _
    $region27: #{_linear_forward_2d.1} parent=1 // pred_check_branch
      %105 = sbr.rel (0) target = $region29
    $region28: #{_linear_forward_2d.1} parent=1 // pred_region
      %107 = dma.done [#allocation4], 256
    $region29: #{_linear_forward_2d.1} parent=1 // pred_fallthru
      _
    %108 = vsyncpa [#allocation3], 1
    %109 = vsyncpa [#allocation6], 1
    %110 = vsyncpa [#allocation4], 1

</llo_original>
